<compile_context>
chip_gen: v6e
topology: v6e:2x2x1
jax: 0.10.0
libtpu: 0.0.40
codegen_flags: <defaults>
</compile_context>

<pallas_src>
import functools

import jax
import jax.numpy as jnp
from jax.experimental import pallas as pl
from jax.experimental.pallas import tpu as pltpu

F_IN = 1000       # mnasnet1_0 classifier output
HIDDEN = 256      # l1 output
N_OUT = 6         # l2 output
NOUT_PAD = 128    # lane-dense padded output width


# ----------------------------------------------------------------------------
# Pallas kernel: fused  Linear(1000->256) -> ReLU -> Dropout(0.75) -> Linear(256->6, padded 128)
# ----------------------------------------------------------------------------
def _head_kernel(x_ref, w1_ref, b1_ref, w2_ref, b2_ref, *rest, p_drop, training):
    if training:
        bits_ref, out_ref = rest
    else:
        (out_ref,) = rest

    # l1: bf16 @ bf16 -> f32 accumulate on the MXU
    h = jnp.dot(x_ref[...], w1_ref[...], preferred_element_type=jnp.float32)
    h = h + b1_ref[...]                                  # (TB, 256) + (1, 256)
    h = jnp.maximum(h, 0.0)                              # ReLU (VPU)

    if training:
        # Inverted dropout (matches torch.nn.Dropout): keep iff bits >= p*2^32
        # (keep prob = 1-p); kept values scaled by 1/(1-p). Single select + mul.
        thresh = jnp.uint32(int(round(p_drop * 4294967296.0)))
        keep = bits_ref[...] >= thresh
        h = jnp.where(keep, h * jnp.float32(1.0 / (1.0 - p_drop)), 0.0)

    # l2 on the MXU; lane-dense (TB, 128) store, true 6 columns sliced in the wrapper.
    out = jnp.dot(h, w2_ref[...], preferred_element_type=jnp.float32)
    out_ref[...] = (out + b2_ref[...]).astype(out_ref.dtype)


def classifier_head(x, w1, b1, w2, b2, key=None, *, p_drop=0.75, training=True):
    """x: (B, 1000) features from the (omitted) mnasnet backbone. Returns (B, 6) f32."""
    B, f_in = x.shape
    hidden = w1.shape[1]
    n_out = w2.shape[1]

    # ---- batch tile: large tiles amortize per-step overhead; multiple of 8 sublanes ----
    TB = 512
    if B < TB:
        TB = max(8, ((B + 7) // 8) * 8)
    B_pad = ((B + TB - 1) // TB) * TB
    grid = (pl.cdiv(B_pad, TB),)

    # ---- stage operands: bf16 for the big streamed matmul, lane-dense padded l2 ----
    x_p = jnp.zeros((B_pad, f_in), jnp.bfloat16).at[:B].set(x.astype(jnp.bfloat16))
    w1_bf = w1.astype(jnp.bfloat16)
    b1_2d = b1.reshape(1, hidden).astype(jnp.float32)
    w2_pad = jnp.zeros((hidden, NOUT_PAD), jnp.float32).at[:, :n_out].set(
        w2.astype(jnp.float32))
    b2_pad = jnp.zeros((1, NOUT_PAD), jnp.float32).at[:, :n_out].set(
        b2.reshape(1, n_out).astype(jnp.float32))

    in_specs = [
        pl.BlockSpec((TB, f_in), lambda i: (i, 0)),          # x tile (streamed)
        pl.BlockSpec((f_in, hidden), lambda i: (0, 0)),       # w1 (VMEM-resident)
        pl.BlockSpec((1, hidden), lambda i: (0, 0)),          # b1
        pl.BlockSpec((hidden, NOUT_PAD), lambda i: (0, 0)),   # w2 (padded)
        pl.BlockSpec((1, NOUT_PAD), lambda i: (0, 0)),        # b2 (padded)
    ]
    args = [x_p, w1_bf, b1_2d, w2_pad, b2_pad]

    if training:
        if key is None:
            key = jax.random.PRNGKey(0)
        # Random bits generated outside the kernel: independent per row/feature, no
        # per-tile mask reuse, and no TPU-only PRNG primitives in the kernel body.
        bits = jax.random.bits(key, (B_pad, hidden), jnp.uint32)
        in_specs.append(pl.BlockSpec((TB, hidden), lambda i: (i, 0)))
        args.append(bits)

    kernel = functools.partial(_head_kernel, p_drop=p_drop, training=training)
    out = pl.pallas_call(
        kernel,
        out_shape=jax.ShapeDtypeStruct((B_pad, NOUT_PAD), jnp.float32),
        grid=grid,
        in_specs=in_specs,
        out_specs=pl.BlockSpec((TB, NOUT_PAD), lambda i: (i, 0)),
        compiler_params=pltpu.CompilerParams(
            dimension_semantics=("parallel",),       # shard batch tiles across v7x's 2 TCs
            vmem_limit_bytes=32 * 1024 * 1024,       # ~6 MiB used at TB=512; headroom on all gens
        ),
    )(*args)
    return out[:B, :n_out]


# ----------------------------------------------------------------------------
# Deterministic parameter init (PyTorch nn.Linear-style uniform(+-1/sqrt(fan_in)))
# ----------------------------------------------------------------------------
def init_params(key):
    k1, k2, k3, k4 = jax.random.split(key, 4)
    lim1 = 1.0 / jnp.sqrt(float(F_IN))
    lim2 = 1.0 / jnp.sqrt(float(HIDDEN))
    w1 = jax.random.uniform(k1, (F_IN, HIDDEN), jnp.float32, -lim1, lim1)
    b1 = jax.random.uniform(k2, (1, HIDDEN), jnp.float32, -lim1, lim1)
    w2 = jax.random.uniform(k3, (HIDDEN, N_OUT), jnp.float32, -lim2, lim2)
    b2 = jax.random.uniform(k4, (1, N_OUT), jnp.float32, -lim2, lim2)
    return w1, b1, w2, b2


def reference_head_eval(x, w1, b1, w2, b2):
    """Pure-JAX reference (eval mode: dropout is identity). Mirrors the kernel's bf16 l1."""
    h = jnp.dot(x.astype(jnp.bfloat16), w1.astype(jnp.bfloat16),
                preferred_element_type=jnp.float32) + b1
    h = jnp.maximum(h, 0.0)
    return jnp.dot(h, w2, preferred_element_type=jnp.float32) + b2


if __name__ == "__main__":
    key = jax.random.PRNGKey(0)
    k_param, k_feat, k_drop = jax.random.split(key, 3)

    # Synthetic stand-in for the mnasnet1_0 backbone output: (B, 1000) features.
    B = 2
    x = jax.random.normal(k_feat, (B, F_IN), jnp.float32)
    w1, b1, w2, b2 = init_params(k_param)

    # Eval-mode (dropout off) correctness check against pure-JAX reference.
    y_eval = classifier_head(x, w1, b1, w2, b2, training=False)
    y_eval = jax.block_until_ready(y_eval)
    y_ref = reference_head_eval(x, w1, b1, w2, b2)
    assert y_eval.shape == (B, N_OUT)
    assert jnp.allclose(y_eval, y_ref, atol=1e-2, rtol=1e-2)

    # Training-mode forward (dropout p=0.75 via integer-threshold random bits).
    y_train = classifier_head(x, w1, b1, w2, b2, key=k_drop, training=True)
    y_train = jax.block_until_ready(y_train)
    assert y_train.shape == (B, N_OUT)
    assert bool(jnp.all(jnp.isfinite(y_train)))

    print("KERNEL_OK")
</pallas_src>

<mosaic_0001>
module attributes {stable_mosaic.version = 11 : i64} {
  func.func @_head_kernel(%arg0: i32, %arg1: memref<8x1000xbf16, #tpu.memory_space<vmem>>, %arg2: memref<1000x256xbf16, #tpu.memory_space<vmem>>, %arg3: memref<1x256xf32, #tpu.memory_space<vmem>>, %arg4: memref<256x128xf32, #tpu.memory_space<vmem>>, %arg5: memref<1x128xf32, #tpu.memory_space<vmem>>, %arg6: memref<8x128xf32, #tpu.memory_space<vmem>>) attributes {dimension_semantics = [#tpu.dimension_semantics<parallel>], iteration_bounds = array<i64: 1>, scalar_prefetch = 0 : i64, scratch_operands = 0 : i64, tpu.core_type = #tpu.core_type<tc>, window_params = [{transform_indices = @transform_0, window_bounds = array<i64: 8, 1000>}, {pipeline_mode = #tpu.pipeline_mode<synchronous>, transform_indices = @transform_1, window_bounds = array<i64: 1000, 256>}, {pipeline_mode = #tpu.pipeline_mode<synchronous>, transform_indices = @transform_2, window_bounds = array<i64: 1, 256>}, {pipeline_mode = #tpu.pipeline_mode<synchronous>, transform_indices = @transform_3, window_bounds = array<i64: 256, 128>}, {pipeline_mode = #tpu.pipeline_mode<synchronous>, transform_indices = @transform_4, window_bounds = array<i64: 1, 128>}, {transform_indices = @transform_5, window_bounds = array<i64: 8, 128>}]} {
    %c0 = arith.constant 0 : index
    %c0_0 = arith.constant 0 : index
    %0 = vector.load %arg1[%c0, %c0_0] : memref<8x1000xbf16, #tpu.memory_space<vmem>>, vector<8x1000xbf16>
    %c0_1 = arith.constant 0 : index
    %c0_2 = arith.constant 0 : index
    %1 = vector.load %arg2[%c0_1, %c0_2] : memref<1000x256xbf16, #tpu.memory_space<vmem>>, vector<1000x256xbf16>
    %cst = arith.constant dense<0.000000e+00> : vector<8x256xf32>
    %2 = tpu.matmul %0, %1, %cst {dimension_numbers = #tpu.dot_dimension_numbers<[1], [0], [0], [1], [0, 0, 1, 1], [], []>} : vector<8x1000xbf16>, vector<1000x256xbf16>, vector<8x256xf32> -> vector<8x256xf32>
    %c0_3 = arith.constant 0 : index
    %c0_4 = arith.constant 0 : index
    %3 = vector.load %arg3[%c0_3, %c0_4] : memref<1x256xf32, #tpu.memory_space<vmem>>, vector<1x256xf32>
    %4 = vector.broadcast %3 : vector<1x256xf32> to vector<8x256xf32>
    %5 = arith.addf %2, %4 : vector<8x256xf32>
    %cst_5 = arith.constant 0.000000e+00 : f32
    %6 = vector.broadcast %cst_5 : f32 to vector<8x256xf32>
    %7 = arith.maximumf %5, %6 : vector<8x256xf32>
    %c0_6 = arith.constant 0 : index
    %c0_7 = arith.constant 0 : index
    %8 = vector.load %arg4[%c0_6, %c0_7] : memref<256x128xf32, #tpu.memory_space<vmem>>, vector<256x128xf32>
    %cst_8 = arith.constant dense<0.000000e+00> : vector<8x128xf32>
    %9 = tpu.matmul %7, %8, %cst_8 {dimension_numbers = #tpu.dot_dimension_numbers<[1], [0], [0], [1], [0, 0, 1, 1], [], []>} : vector<8x256xf32>, vector<256x128xf32>, vector<8x128xf32> -> vector<8x128xf32>
    %c0_9 = arith.constant 0 : index
    %c0_10 = arith.constant 0 : index
    %10 = vector.load %arg5[%c0_9, %c0_10] : memref<1x128xf32, #tpu.memory_space<vmem>>, vector<1x128xf32>
    %11 = vector.broadcast %10 : vector<1x128xf32> to vector<8x128xf32>
    %12 = arith.addf %9, %11 : vector<8x128xf32>
    %c0_11 = arith.constant 0 : index
    %c0_12 = arith.constant 0 : index
    %13 = vector.load %arg6[%c0_11, %c0_12] : memref<8x128xf32, #tpu.memory_space<vmem>>, vector<8x128xf32>
    tpu.vector_store %arg6[%c0_11, %c0_12], %12 {strides = array<i32>} : memref<8x128xf32, #tpu.memory_space<vmem>>, vector<8x128xf32>,
    return
  }
  func.func @transform_0(%arg0: i32) -> (i32, i32) {
    %c0_i32 = arith.constant 0 : i32
    %c0_i32_0 = arith.constant 0 : i32
    return %arg0, %c0_i32 : i32, i32
  }
  func.func @transform_1(%arg0: i32) -> (i32, i32) {
    %c0_i32 = arith.constant 0 : i32
    %c0_i32_0 = arith.constant 0 : i32
    %c0_i32_1 = arith.constant 0 : i32
    return %c0_i32, %c0_i32_0 : i32, i32
  }
  func.func @transform_2(%arg0: i32) -> (i32, i32) {
    %c0_i32 = arith.constant 0 : i32
    %c0_i32_0 = arith.constant 0 : i32
    %c0_i32_1 = arith.constant 0 : i32
    return %c0_i32, %c0_i32_0 : i32, i32
  }
  func.func @transform_3(%arg0: i32) -> (i32, i32) {
    %c0_i32 = arith.constant 0 : i32
    %c0_i32_0 = arith.constant 0 : i32
    %c0_i32_1 = arith.constant 0 : i32
    return %c0_i32, %c0_i32_0 : i32, i32
  }
  func.func @transform_4(%arg0: i32) -> (i32, i32) {
    %c0_i32 = arith.constant 0 : i32
    %c0_i32_0 = arith.constant 0 : i32
    %c0_i32_1 = arith.constant 0 : i32
    return %c0_i32, %c0_i32_0 : i32, i32
  }
  func.func @transform_5(%arg0: i32) -> (i32, i32) {
    %c0_i32 = arith.constant 0 : i32
    %c0_i32_0 = arith.constant 0 : i32
    return %arg0, %c0_i32 : i32, i32
  }
}

</mosaic_0001>

<llo_original>
// kernel: tpu_custom_call.1
$region0: #{tpu_custom_call.1}
  #allocation0 [shape = 'u32[]', space=smem, size = 0x4, offset = 0x4, fixed_abs, tag = 'smem constant byte address 0x4 - core index']
  #allocation1 [shape = 'u32[144,128]{1,0:T(1,128)}', space=vmem, size = 0x12000, scoped, tag = 'internal scratch']
  %s0 = inlined_call_operand.hbm [shape: bf16[8,1000], index: 0, kind: input, shape index: {}]
  %s1 = inlined_call_operand.hbm [shape: bf16[1000,256], index: 1, kind: input, shape index: {}]
  %s2 = inlined_call_operand.vmem [shape: f32[1,256], index: 2, kind: input, shape index: {}]
  %s3 = inlined_call_operand.hbm [shape: f32[256,128], index: 3, kind: input, shape index: {}]
  %s4 = inlined_call_operand.vmem [shape: f32[1,128], index: 4, kind: input, shape index: {}]
  %s5 = inlined_call_operand.hbm [shape: f32[8,128], index: 5, kind: output, shape index: {}]
  %s6 = sld [smem:[#allocation0]]
  $region42: #{tpu_custom_call.1} parent=0
    _
  %s8 = ssub.s32 1, %s6
  %s9 = scalar_select 0, %s8, %s6
  $region1: #{tpu_custom_call.1} parent=0
    #allocation2 [shape = 'u8[16384]{0}', space=vmem, size = 0x4000, scoped, tag = 'input window, operand 0, single buffered']
    #allocation3 [shape = 's32[1]{0}', space=sflag, size = 0x4, scoped, tag = 'scoped memory for tpu_custom_call.1']
    #allocation4 [shape = 's32[1]{0}', space=sflag, size = 0x4, scoped, tag = 'scoped memory for tpu_custom_call.1']
    #allocation5 [shape = 'u8[512000]{0}', space=vmem, size = 0x7d000, scoped, tag = 'input window, operand 1, single buffered']
    #allocation6 [shape = 's32[1]{0}', space=sflag, size = 0x4, scoped, tag = 'scoped memory for tpu_custom_call.1']
    #allocation7 [shape = 'u8[131072]{0}', space=vmem, size = 0x20000, scoped, tag = 'input window, operand 3, single buffered']
    #allocation8 [shape = 'u8[4096]{0}', space=vmem, size = 0x1000, scoped, tag = 'output window, operand 0, single buffered']
    %10 = vsyncpa [#allocation3], 0
    %11 = vsyncpa [#allocation6], 0
    %12 = vsyncpa [#allocation4], 0
    // Predicated region
    $region2: #{tpu_custom_call.1} parent=1 // pred_check
      _
    $region3: #{tpu_custom_call.1} parent=1 // pred_check_branch
      %14 = sbr.rel (0) target = $region5
    $region4: #{tpu_custom_call.1} parent=1 // pred_region
      %s16 = ssub.s32 512, 512
      %17 = vsyncadd [#allocation3], %s16
      %s19 = sshll.u32 [#allocation2], 4
      %s20 = int_to_ptr.vmem [resolvable:$true] %s19
      %22 = dma.hbm_to_vmem [thread:$0]  %s0, 512, %s20, [#allocation3]
    $region5: #{tpu_custom_call.1} parent=1 // pred_fallthru
      _
    // Predicated region
    $region6: #{tpu_custom_call.1} parent=1 // pred_check
      _
    $region7: #{tpu_custom_call.1} parent=1 // pred_check_branch
      %24 = sbr.rel (0) target = $region9
    $region8: #{tpu_custom_call.1} parent=1 // pred_region
      %s26 = ssub.s32 16000, 16000
      %27 = vsyncadd [#allocation6], %s26
      %s28 = sshll.u32 [#allocation5], 4
      %s29 = int_to_ptr.vmem [resolvable:$true] %s28
      %34 = dma.hbm_to_vmem [thread:$0]  %s1, 16000, %s29, [#allocation6], 128, 128, 8
    $region9: #{tpu_custom_call.1} parent=1 // pred_fallthru
      _
    // Predicated region
    $region10: #{tpu_custom_call.1} parent=1 // pred_check
      _
    $region11: #{tpu_custom_call.1} parent=1 // pred_check_branch
      %36 = sbr.rel (0) target = $region13
    $region12: #{tpu_custom_call.1} parent=1 // pred_region
      _
    $region13: #{tpu_custom_call.1} parent=1 // pred_fallthru
      _
    // Predicated region
    $region14: #{tpu_custom_call.1} parent=1 // pred_check
      _
    $region15: #{tpu_custom_call.1} parent=1 // pred_check_branch
      %38 = sbr.rel (0) target = $region17
    $region16: #{tpu_custom_call.1} parent=1 // pred_region
      %s40 = ssub.s32 4096, 4096
      %41 = vsyncadd [#allocation6], %s40
      %s42 = sshll.u32 [#allocation7], 4
      %s43 = int_to_ptr.vmem [resolvable:$true] %s42
      %48 = dma.hbm_to_vmem [thread:$0]  %s3, 4096, %s43, [#allocation6], 128, 128, 8
    $region17: #{tpu_custom_call.1} parent=1 // pred_fallthru
      _
    // Predicated region
    $region18: #{tpu_custom_call.1} parent=1 // pred_check
      _
    $region19: #{tpu_custom_call.1} parent=1 // pred_check_branch
      %50 = sbr.rel (0) target = $region21
    $region20: #{tpu_custom_call.1} parent=1 // pred_region
      _
    $region21: #{tpu_custom_call.1} parent=1 // pred_fallthru
      _
    // Predicated region
    $region22: #{tpu_custom_call.1} parent=1 // pred_check
      _
    $region23: #{tpu_custom_call.1} parent=1 // pred_check_branch
      %52 = sbr.rel (0) target = $region25
    $region24: #{tpu_custom_call.1} parent=1 // pred_region
      %53 = dma.done [#allocation3], 512
    $region25: #{tpu_custom_call.1} parent=1 // pred_fallthru
      _
    // Predicated region
    $region26: #{tpu_custom_call.1} parent=1 // pred_check
      _
    $region27: #{tpu_custom_call.1} parent=1 // pred_check_branch
      %55 = sbr.rel (0) target = $region29
    $region28: #{tpu_custom_call.1} parent=1 // pred_region
      %56 = dma.done [#allocation6], 16000
    $region29: #{tpu_custom_call.1} parent=1 // pred_fallthru
      _
    // Predicated region
    $region30: #{tpu_custom_call.1} parent=1 // pred_check
      _
    $region31: #{tpu_custom_call.1} parent=1 // pred_check_branch
      %58 = sbr.rel (0) target = $region33
    $region32: #{tpu_custom_call.1} parent=1 // pred_region
      %59 = dma.done [#allocation6], 4096
    $region33: #{tpu_custom_call.1} parent=1 // pred_fallthru
      _
    %v61 = vld [vmem:[#allocation2] sm:$0xff]
    %v62 = vld [vmem:[#allocation2 + $0x8] sm:$0xff]
    %v63 = vld [vmem:[#allocation2 + $0x10] sm:$0xff]
    %v64 = vld [vmem:[#allocation2 + $0x18] sm:$0xff]
    %v65 = vld [vmem:[#allocation5] sm:$0xff]
    %v66 = vld [vmem:[#allocation5 + $0x8] sm:$0xff]
    %v67 = vld [vmem:[#allocation5 + $0x10] sm:$0xff]
    %v68 = vld [vmem:[#allocation5 + $0x18] sm:$0xff]
    %v69 = vld [vmem:[#allocation5 + $0x20] sm:$0xff]
    %v70 = vld [vmem:[#allocation5 + $0x28] sm:$0xff]
    %v71 = vld [vmem:[#allocation5 + $0x30] sm:$0xff]
    %v72 = vld [vmem:[#allocation5 + $0x38] sm:$0xff]
    %v73 = vld [vmem:[#allocation5 + $0x40] sm:$0xff]
    %v74 = vld [vmem:[#allocation5 + $0x48] sm:$0xff]
    %v75 = vld [vmem:[#allocation5 + $0x50] sm:$0xff]
    %v76 = vld [vmem:[#allocation5 + $0x58] sm:$0xff]
    %v77 = vld [vmem:[#allocation5 + $0x60] sm:$0xff]
    %v78 = vld [vmem:[#allocation5 + $0x68] sm:$0xff]
    %v79 = vld [vmem:[#allocation5 + $0x70] sm:$0xff]
    %v80 = vld [vmem:[#allocation5 + $0x78] sm:$0xff]
    %v81 = vld [vmem:[#allocation5 + $0x80] sm:$0xff]
    %v82 = vld [vmem:[#allocation5 + $0x88] sm:$0xff]
    %v83 = vld [vmem:[#allocation5 + $0x90] sm:$0xff]
    %v84 = vld [vmem:[#allocation5 + $0x98] sm:$0xff]
    %v85 = vld [vmem:[#allocation5 + $0xa0] sm:$0xff]
    %v86 = vld [vmem:[#allocation5 + $0xa8] sm:$0xff]
    %v87 = vld [vmem:[#allocation5 + $0xb0] sm:$0xff]
    %v88 = vld [vmem:[#allocation5 + $0xb8] sm:$0xff]
    %v89 = vld [vmem:[#allocation5 + $0xc0] sm:$0xff]
    %v90 = vld [vmem:[#allocation5 + $0xc8] sm:$0xff]
    %v91 = vld [vmem:[#allocation5 + $0xd0] sm:$0xff]
    %v92 = vld [vmem:[#allocation5 + $0xd8] sm:$0xff]
    %v93 = vld [vmem:[#allocation5 + $0xe0] sm:$0xff]
    %v94 = vld [vmem:[#allocation5 + $0xe8] sm:$0xff]
    %v95 = vld [vmem:[#allocation5 + $0xf0] sm:$0xff]
    %v96 = vld [vmem:[#allocation5 + $0xf8] sm:$0xff]
    %v97 = vld [vmem:[#allocation5 + $0x100] sm:$0xff]
    %v98 = vld [vmem:[#allocation5 + $0x108] sm:$0xff]
    %v99 = vld [vmem:[#allocation5 + $0x110] sm:$0xff]
    %v100 = vld [vmem:[#allocation5 + $0x118] sm:$0xff]
    %v101 = vld [vmem:[#allocation5 + $0x120] sm:$0xff]
    %v102 = vld [vmem:[#allocation5 + $0x128] sm:$0xff]
    %v103 = vld [vmem:[#allocation5 + $0x130] sm:$0xff]
    %v104 = vld [vmem:[#allocation5 + $0x138] sm:$0xff]
    %v105 = vld [vmem:[#allocation5 + $0x140] sm:$0xff]
    %v106 = vld [vmem:[#allocation5 + $0x148] sm:$0xff]
    %v107 = vld [vmem:[#allocation5 + $0x150] sm:$0xff]
    %v108 = vld [vmem:[#allocation5 + $0x158] sm:$0xff]
    %v109 = vld [vmem:[#allocation5 + $0x160] sm:$0xff]
    %v110 = vld [vmem:[#allocation5 + $0x168] sm:$0xff]
    %v111 = vld [vmem:[#allocation5 + $0x170] sm:$0xff]
    %v112 = vld [vmem:[#allocation5 + $0x178] sm:$0xff]
    %v113 = vld [vmem:[#allocation5 + $0x180] sm:$0xff]
    %v114 = vld [vmem:[#allocation5 + $0x188] sm:$0xff]
    %v115 = vld [vmem:[#allocation5 + $0x190] sm:$0xff]
    %v116 = vld [vmem:[#allocation5 + $0x198] sm:$0xff]
    %v117 = vld [vmem:[#allocation5 + $0x1a0] sm:$0xff]
    %v118 = vld [vmem:[#allocation5 + $0x1a8] sm:$0xff]
    %v119 = vld [vmem:[#allocation5 + $0x1b0] sm:$0xff]
    %v120 = vld [vmem:[#allocation5 + $0x1b8] sm:$0xff]
    %v121 = vld [vmem:[#allocation5 + $0x1c0] sm:$0xff]
    %v122 = vld [vmem:[#allocation5 + $0x1c8] sm:$0xff]
    %v123 = vld [vmem:[#allocation5 + $0x1d0] sm:$0xff]
    %v124 = vld [vmem:[#allocation5 + $0x1d8] sm:$0xff]
    %v125 = vld [vmem:[#allocation5 + $0x1e0] sm:$0xff]
    %v126 = vld [vmem:[#allocation5 + $0x1e8] sm:$0xff]
    %v127 = vld [vmem:[#allocation5 + $0x1f0] sm:$0xff]
    %v128 = vld [vmem:[#allocation5 + $0x1f8] sm:$0xff]
    %v129 = vld [vmem:[#allocation5 + $0x200] sm:$0xff]
    %v130 = vld [vmem:[#allocation5 + $0x208] sm:$0xff]
    %v131 = vld [vmem:[#allocation5 + $0x210] sm:$0xff]
    %v132 = vld [vmem:[#allocation5 + $0x218] sm:$0xff]
    %v133 = vld [vmem:[#allocation5 + $0x220] sm:$0xff]
    %v134 = vld [vmem:[#allocation5 + $0x228] sm:$0xff]
    %v135 = vld [vmem:[#allocation5 + $0x230] sm:$0xff]
    %v136 = vld [vmem:[#allocation5 + $0x238] sm:$0xff]
    %v137 = vld [vmem:[#allocation5 + $0x240] sm:$0xff]
    %v138 = vld [vmem:[#allocation5 + $0x248] sm:$0xff]
    %v139 = vld [vmem:[#allocation5 + $0x250] sm:$0xff]
    %v140 = vld [vmem:[#allocation5 + $0x258] sm:$0xff]
    %v141 = vld [vmem:[#allocation5 + $0x260] sm:$0xff]
    %v142 = vld [vmem:[#allocation5 + $0x268] sm:$0xff]
    %v143 = vld [vmem:[#allocation5 + $0x270] sm:$0xff]
    %v144 = vld [vmem:[#allocation5 + $0x278] sm:$0xff]
    %v145 = vld [vmem:[#allocation5 + $0x280] sm:$0xff]
    %v146 = vld [vmem:[#allocation5 + $0x288] sm:$0xff]
    %v147 = vld [vmem:[#allocation5 + $0x290] sm:$0xff]
    %v148 = vld [vmem:[#allocation5 + $0x298] sm:$0xff]
    %v149 = vld [vmem:[#allocation5 + $0x2a0] sm:$0xff]
    %v150 = vld [vmem:[#allocation5 + $0x2a8] sm:$0xff]
    %v151 = vld [vmem:[#allocation5 + $0x2b0] sm:$0xff]
    %v152 = vld [vmem:[#allocation5 + $0x2b8] sm:$0xff]
    %v153 = vld [vmem:[#allocation5 + $0x2c0] sm:$0xff]
    %v154 = vld [vmem:[#allocation5 + $0x2c8] sm:$0xff]
    %v155 = vld [vmem:[#allocation5 + $0x2d0] sm:$0xff]
    %v156 = vld [vmem:[#allocation5 + $0x2d8] sm:$0xff]
    %v157 = vld [vmem:[#allocation5 + $0x2e0] sm:$0xff]
    %v158 = vld [vmem:[#allocation5 + $0x2e8] sm:$0xff]
    %v159 = vld [vmem:[#allocation5 + $0x2f0] sm:$0xff]
    %v160 = vld [vmem:[#allocation5 + $0x2f8] sm:$0xff]
    %v161 = vld [vmem:[#allocation5 + $0x300] sm:$0xff]
    %v162 = vld [vmem:[#allocation5 + $0x308] sm:$0xff]
    %v163 = vld [vmem:[#allocation5 + $0x310] sm:$0xff]
    %v164 = vld [vmem:[#allocation5 + $0x318] sm:$0xff]
    %v165 = vld [vmem:[#allocation5 + $0x320] sm:$0xff]
    %v166 = vld [vmem:[#allocation5 + $0x328] sm:$0xff]
    %v167 = vld [vmem:[#allocation5 + $0x330] sm:$0xff]
    %v168 = vld [vmem:[#allocation5 + $0x338] sm:$0xff]
    %v169 = vld [vmem:[#allocation5 + $0x340] sm:$0xff]
    %v170 = vld [vmem:[#allocation5 + $0x348] sm:$0xff]
    %v171 = vld [vmem:[#allocation5 + $0x350] sm:$0xff]
    %v172 = vld [vmem:[#allocation5 + $0x358] sm:$0xff]
    %v173 = vld [vmem:[#allocation5 + $0x360] sm:$0xff]
    %v174 = vld [vmem:[#allocation5 + $0x368] sm:$0xff]
    %v175 = vld [vmem:[#allocation5 + $0x370] sm:$0xff]
    %v176 = vld [vmem:[#allocation5 + $0x378] sm:$0xff]
    %v177 = vld [vmem:[#allocation5 + $0x380] sm:$0xff]
    %v178 = vld [vmem:[#allocation5 + $0x388] sm:$0xff]
    %v179 = vld [vmem:[#allocation5 + $0x390] sm:$0xff]
    %v180 = vld [vmem:[#allocation5 + $0x398] sm:$0xff]
    %v181 = vld [vmem:[#allocation5 + $0x3a0] sm:$0xff]
    %v182 = vld [vmem:[#allocation5 + $0x3a8] sm:$0xff]
    %v183 = vld [vmem:[#allocation5 + $0x3b0] sm:$0xff]
    %v184 = vld [vmem:[#allocation5 + $0x3b8] sm:$0xff]
    %v185 = vld [vmem:[#allocation5 + $0x3c0] sm:$0xff]
    %v186 = vld [vmem:[#allocation5 + $0x3c8] sm:$0xff]
    %v187 = vld [vmem:[#allocation5 + $0x3d0] sm:$0xff]
    %v188 = vld [vmem:[#allocation5 + $0x3d8] sm:$0xff]
    %v189 = vld [vmem:[#allocation5 + $0x3e0] sm:$0xff]
    %v190 = vld [vmem:[%s2] sm:$0x3]
    %v192 = vlaneseq
    %v193 = vshrl.u32 %v192, 7
    %v194 = vsub.s32 0, %v193
    %v195 = vrot.slane %v190, %v194
    %v196 = vlaneseq
    %v197 = vshrl.u32 %v196, 7
    %v198 = vsub.s32 1, %v197
    %v199 = vrot.slane %v190, %v198
    %v206 = vunpack.c.l.b16 %v61
    %v207 = vunpack.c.h.b16 %v61
    %v208 = vunpack.c.l.b16 %v62
    %v209 = vunpack.c.h.b16 %v62
    %v210 = vunpack.c.l.b16 %v63
    %v211 = vunpack.c.h.b16 %v63
    %v212 = vunpack.c.l.b16 %v64
    %v213 = vunpack.c.h.b16 %v64
    %v214 = vpack.c.b16 %v206, %v206
    %v215 = vpack.c.b16 %v207, %v207
    %v216 = vpack.c.b16 %v208, %v208
    %v217 = vpack.c.b16 %v209, %v209
    %v218 = vpack.c.b16 %v210, %v210
    %v219 = vpack.c.b16 %v211, %v211
    %v220 = vpack.c.b16 %v212, %v212
    %v221 = vpack.c.b16 %v213, %v213
    %v354 = vunpack.c.l.b16 %v65
    %v355 = vunpack.c.h.b16 %v65
    %v356 = vunpack.c.l.b16 %v66
    %v357 = vunpack.c.h.b16 %v66
    %v358 = vunpack.c.l.b16 %v67
    %v359 = vunpack.c.h.b16 %v67
    %v360 = vunpack.c.l.b16 %v68
    %v361 = vunpack.c.h.b16 %v68
    %v362 = vunpack.c.l.b16 %v69
    %v363 = vunpack.c.h.b16 %v69
    %v364 = vunpack.c.l.b16 %v70
    %v365 = vunpack.c.h.b16 %v70
    %v366 = vunpack.c.l.b16 %v71
    %v367 = vunpack.c.h.b16 %v71
    %v368 = vunpack.c.l.b16 %v72
    %v369 = vunpack.c.h.b16 %v72
    %v370 = vunpack.c.l.b16 %v73
    %v371 = vunpack.c.h.b16 %v73
    %v372 = vunpack.c.l.b16 %v74
    %v373 = vunpack.c.h.b16 %v74
    %v374 = vunpack.c.l.b16 %v75
    %v375 = vunpack.c.h.b16 %v75
    %v376 = vunpack.c.l.b16 %v76
    %v377 = vunpack.c.h.b16 %v76
    %v378 = vunpack.c.l.b16 %v77
    %v379 = vunpack.c.h.b16 %v77
    %v380 = vunpack.c.l.b16 %v78
    %v381 = vunpack.c.h.b16 %v78
    %v382 = vunpack.c.l.b16 %v79
    %v383 = vunpack.c.h.b16 %v79
    %v384 = vunpack.c.l.b16 %v80
    %v385 = vunpack.c.h.b16 %v80
    %v386 = vunpack.c.l.b16 %v81
    %v387 = vunpack.c.h.b16 %v81
    %v388 = vunpack.c.l.b16 %v82
    %v389 = vunpack.c.h.b16 %v82
    %v390 = vunpack.c.l.b16 %v83
    %v391 = vunpack.c.h.b16 %v83
    %v392 = vunpack.c.l.b16 %v84
    %v393 = vunpack.c.h.b16 %v84
    %v394 = vunpack.c.l.b16 %v85
    %v395 = vunpack.c.h.b16 %v85
    %v396 = vunpack.c.l.b16 %v86
    %v397 = vunpack.c.h.b16 %v86
    %v398 = vunpack.c.l.b16 %v87
    %v399 = vunpack.c.h.b16 %v87
    %v400 = vunpack.c.l.b16 %v88
    %v401 = vunpack.c.h.b16 %v88
    %v402 = vunpack.c.l.b16 %v89
    %v403 = vunpack.c.h.b16 %v89
    %v404 = vunpack.c.l.b16 %v90
    %v405 = vunpack.c.h.b16 %v90
    %v406 = vunpack.c.l.b16 %v91
    %v407 = vunpack.c.h.b16 %v91
    %v408 = vunpack.c.l.b16 %v92
    %v409 = vunpack.c.h.b16 %v92
    %v410 = vunpack.c.l.b16 %v93
    %v411 = vunpack.c.h.b16 %v93
    %v412 = vunpack.c.l.b16 %v94
    %v413 = vunpack.c.h.b16 %v94
    %v414 = vunpack.c.l.b16 %v95
    %v415 = vunpack.c.h.b16 %v95
    %v416 = vunpack.c.l.b16 %v96
    %v417 = vunpack.c.h.b16 %v96
    %v418 = vunpack.c.l.b16 %v97
    %v419 = vunpack.c.h.b16 %v97
    %v420 = vunpack.c.l.b16 %v98
    %v421 = vunpack.c.h.b16 %v98
    %v422 = vunpack.c.l.b16 %v99
    %v423 = vunpack.c.h.b16 %v99
    %v424 = vunpack.c.l.b16 %v100
    %v425 = vunpack.c.h.b16 %v100
    %v426 = vunpack.c.l.b16 %v101
    %v427 = vunpack.c.h.b16 %v101
    %v428 = vunpack.c.l.b16 %v102
    %v429 = vunpack.c.h.b16 %v102
    %v430 = vunpack.c.l.b16 %v103
    %v431 = vunpack.c.h.b16 %v103
    %v432 = vunpack.c.l.b16 %v104
    %v433 = vunpack.c.h.b16 %v104
    %v434 = vunpack.c.l.b16 %v105
    %v435 = vunpack.c.h.b16 %v105
    %v436 = vunpack.c.l.b16 %v106
    %v437 = vunpack.c.h.b16 %v106
    %v438 = vunpack.c.l.b16 %v107
    %v439 = vunpack.c.h.b16 %v107
    %v440 = vunpack.c.l.b16 %v108
    %v441 = vunpack.c.h.b16 %v108
    %v442 = vunpack.c.l.b16 %v109
    %v443 = vunpack.c.h.b16 %v109
    %v444 = vunpack.c.l.b16 %v110
    %v445 = vunpack.c.h.b16 %v110
    %v446 = vunpack.c.l.b16 %v111
    %v447 = vunpack.c.h.b16 %v111
    %v448 = vunpack.c.l.b16 %v112
    %v449 = vunpack.c.h.b16 %v112
    %v450 = vunpack.c.l.b16 %v113
    %v451 = vunpack.c.h.b16 %v113
    %v452 = vunpack.c.l.b16 %v114
    %v453 = vunpack.c.h.b16 %v114
    %v454 = vunpack.c.l.b16 %v115
    %v455 = vunpack.c.h.b16 %v115
    %v456 = vunpack.c.l.b16 %v116
    %v457 = vunpack.c.h.b16 %v116
    %v458 = vunpack.c.l.b16 %v117
    %v459 = vunpack.c.h.b16 %v117
    %v460 = vunpack.c.l.b16 %v118
    %v461 = vunpack.c.h.b16 %v118
    %v462 = vunpack.c.l.b16 %v119
    %v463 = vunpack.c.h.b16 %v119
    %v464 = vunpack.c.l.b16 %v120
    %v465 = vunpack.c.h.b16 %v120
    %v466 = vunpack.c.l.b16 %v121
    %v467 = vunpack.c.h.b16 %v121
    %v468 = vunpack.c.l.b16 %v122
    %v469 = vunpack.c.h.b16 %v122
    %v470 = vunpack.c.l.b16 %v123
    %v471 = vunpack.c.h.b16 %v123
    %v472 = vunpack.c.l.b16 %v124
    %v473 = vunpack.c.h.b16 %v124
    %v474 = vunpack.c.l.b16 %v125
    %v475 = vunpack.c.h.b16 %v125
    %v476 = vunpack.c.l.b16 %v126
    %v477 = vunpack.c.h.b16 %v126
    %v478 = vunpack.c.l.b16 %v127
    %v479 = vunpack.c.h.b16 %v127
    %v480 = vunpack.c.l.b16 %v128
    %v481 = vunpack.c.h.b16 %v128
    %v482 = vunpack.c.l.b16 %v129
    %v483 = vunpack.c.h.b16 %v129
    %v484 = vunpack.c.l.b16 %v130
    %v485 = vunpack.c.h.b16 %v130
    %v486 = vunpack.c.l.b16 %v131
    %v487 = vunpack.c.h.b16 %v131
    %v488 = vunpack.c.l.b16 %v132
    %v489 = vunpack.c.h.b16 %v132
    %v490 = vunpack.c.l.b16 %v133
    %v491 = vunpack.c.h.b16 %v133
    %v492 = vunpack.c.l.b16 %v134
    %v493 = vunpack.c.h.b16 %v134
    %v494 = vunpack.c.l.b16 %v135
    %v495 = vunpack.c.h.b16 %v135
    %v496 = vunpack.c.l.b16 %v136
    %v497 = vunpack.c.h.b16 %v136
    %v498 = vunpack.c.l.b16 %v137
    %v499 = vunpack.c.h.b16 %v137
    %v500 = vunpack.c.l.b16 %v138
    %v501 = vunpack.c.h.b16 %v138
    %v502 = vunpack.c.l.b16 %v139
    %v503 = vunpack.c.h.b16 %v139
    %v504 = vunpack.c.l.b16 %v140
    %v505 = vunpack.c.h.b16 %v140
    %v506 = vunpack.c.l.b16 %v141
    %v507 = vunpack.c.h.b16 %v141
    %v508 = vunpack.c.l.b16 %v142
    %v509 = vunpack.c.h.b16 %v142
    %v510 = vunpack.c.l.b16 %v143
    %v511 = vunpack.c.h.b16 %v143
    %v512 = vunpack.c.l.b16 %v144
    %v513 = vunpack.c.h.b16 %v144
    %v514 = vunpack.c.l.b16 %v145
    %v515 = vunpack.c.h.b16 %v145
    %v516 = vunpack.c.l.b16 %v146
    %v517 = vunpack.c.h.b16 %v146
    %v518 = vunpack.c.l.b16 %v147
    %v519 = vunpack.c.h.b16 %v147
    %v520 = vunpack.c.l.b16 %v148
    %v521 = vunpack.c.h.b16 %v148
    %v522 = vunpack.c.l.b16 %v149
    %v523 = vunpack.c.h.b16 %v149
    %v524 = vunpack.c.l.b16 %v150
    %v525 = vunpack.c.h.b16 %v150
    %v526 = vunpack.c.l.b16 %v151
    %v527 = vunpack.c.h.b16 %v151
    %v528 = vunpack.c.l.b16 %v152
    %v529 = vunpack.c.h.b16 %v152
    %v530 = vunpack.c.l.b16 %v153
    %v531 = vunpack.c.h.b16 %v153
    %v532 = vunpack.c.l.b16 %v154
    %v533 = vunpack.c.h.b16 %v154
    %v534 = vunpack.c.l.b16 %v155
    %v535 = vunpack.c.h.b16 %v155
    %v536 = vunpack.c.l.b16 %v156
    %v537 = vunpack.c.h.b16 %v156
    %v538 = vunpack.c.l.b16 %v157
    %v539 = vunpack.c.h.b16 %v157
    %v540 = vunpack.c.l.b16 %v158
    %v541 = vunpack.c.h.b16 %v158
    %v542 = vunpack.c.l.b16 %v159
    %v543 = vunpack.c.h.b16 %v159
    %v544 = vunpack.c.l.b16 %v160
    %v545 = vunpack.c.h.b16 %v160
    %v546 = vunpack.c.l.b16 %v161
    %v547 = vunpack.c.h.b16 %v161
    %v548 = vunpack.c.l.b16 %v162
    %v549 = vunpack.c.h.b16 %v162
    %v550 = vunpack.c.l.b16 %v163
    %v551 = vunpack.c.h.b16 %v163
    %v552 = vunpack.c.l.b16 %v164
    %v553 = vunpack.c.h.b16 %v164
    %v554 = vunpack.c.l.b16 %v165
    %v555 = vunpack.c.h.b16 %v165
    %v556 = vunpack.c.l.b16 %v166
    %v557 = vunpack.c.h.b16 %v166
    %v558 = vunpack.c.l.b16 %v167
    %v559 = vunpack.c.h.b16 %v167
    %v560 = vunpack.c.l.b16 %v168
    %v561 = vunpack.c.h.b16 %v168
    %v562 = vunpack.c.l.b16 %v169
    %v563 = vunpack.c.h.b16 %v169
    %v564 = vunpack.c.l.b16 %v170
    %v565 = vunpack.c.h.b16 %v170
    %v566 = vunpack.c.l.b16 %v171
    %v567 = vunpack.c.h.b16 %v171
    %v568 = vunpack.c.l.b16 %v172
    %v569 = vunpack.c.h.b16 %v172
    %v570 = vunpack.c.l.b16 %v173
    %v571 = vunpack.c.h.b16 %v173
    %v572 = vunpack.c.l.b16 %v174
    %v573 = vunpack.c.h.b16 %v174
    %v574 = vunpack.c.l.b16 %v175
    %v575 = vunpack.c.h.b16 %v175
    %v576 = vunpack.c.l.b16 %v176
    %v577 = vunpack.c.h.b16 %v176
    %v578 = vunpack.c.l.b16 %v177
    %v579 = vunpack.c.h.b16 %v177
    %v580 = vunpack.c.l.b16 %v178
    %v581 = vunpack.c.h.b16 %v178
    %v582 = vunpack.c.l.b16 %v179
    %v583 = vunpack.c.h.b16 %v179
    %v584 = vunpack.c.l.b16 %v180
    %v585 = vunpack.c.h.b16 %v180
    %v586 = vunpack.c.l.b16 %v181
    %v587 = vunpack.c.h.b16 %v181
    %v588 = vunpack.c.l.b16 %v182
    %v589 = vunpack.c.h.b16 %v182
    %v590 = vunpack.c.l.b16 %v183
    %v591 = vunpack.c.h.b16 %v183
    %v592 = vunpack.c.l.b16 %v184
    %v593 = vunpack.c.h.b16 %v184
    %v594 = vunpack.c.l.b16 %v185
    %v595 = vunpack.c.h.b16 %v185
    %v596 = vunpack.c.l.b16 %v186
    %v597 = vunpack.c.h.b16 %v186
    %v598 = vunpack.c.l.b16 %v187
    %v599 = vunpack.c.h.b16 %v187
    %v600 = vunpack.c.l.b16 %v188
    %v601 = vunpack.c.h.b16 %v188
    %v602 = vunpack.c.l.b16 %v189
    %v603 = vunpack.c.h.b16 %v189
    %v604 = vpack.c.b16 %v356, %v354
    %v605 = vpack.c.b16 %v357, %v355
    %v606 = vpack.c.b16 %v360, %v358
    %v607 = vpack.c.b16 %v361, %v359
    %v608 = vpack.c.b16 %v364, %v362
    %v609 = vpack.c.b16 %v365, %v363
    %v610 = vpack.c.b16 %v368, %v366
    %v611 = vpack.c.b16 %v369, %v367
    %v612 = vpack.c.b16 %v372, %v370
    %v613 = vpack.c.b16 %v373, %v371
    %v614 = vpack.c.b16 %v376, %v374
    %v615 = vpack.c.b16 %v377, %v375
    %v616 = vpack.c.b16 %v380, %v378
    %v617 = vpack.c.b16 %v381, %v379
    %v618 = vpack.c.b16 %v384, %v382
    %v619 = vpack.c.b16 %v385, %v383
    %v620 = vpack.c.b16 %v388, %v386
    %v621 = vpack.c.b16 %v389, %v387
    %v622 = vpack.c.b16 %v392, %v390
    %v623 = vpack.c.b16 %v393, %v391
    %v624 = vpack.c.b16 %v396, %v394
    %v625 = vpack.c.b16 %v397, %v395
    %v626 = vpack.c.b16 %v400, %v398
    %v627 = vpack.c.b16 %v401, %v399
    %v628 = vpack.c.b16 %v404, %v402
    %v629 = vpack.c.b16 %v405, %v403
    %v630 = vpack.c.b16 %v408, %v406
    %v631 = vpack.c.b16 %v409, %v407
    %v632 = vpack.c.b16 %v412, %v410
    %v633 = vpack.c.b16 %v413, %v411
    %v634 = vpack.c.b16 %v416, %v414
    %v635 = vpack.c.b16 %v417, %v415
    %v636 = vpack.c.b16 %v420, %v418
    %v637 = vpack.c.b16 %v421, %v419
    %v638 = vpack.c.b16 %v424, %v422
    %v639 = vpack.c.b16 %v425, %v423
    %v640 = vpack.c.b16 %v428, %v426
    %v641 = vpack.c.b16 %v429, %v427
    %v642 = vpack.c.b16 %v432, %v430
    %v643 = vpack.c.b16 %v433, %v431
    %v644 = vpack.c.b16 %v436, %v434
    %v645 = vpack.c.b16 %v437, %v435
    %v646 = vpack.c.b16 %v440, %v438
    %v647 = vpack.c.b16 %v441, %v439
    %v648 = vpack.c.b16 %v444, %v442
    %v649 = vpack.c.b16 %v445, %v443
    %v650 = vpack.c.b16 %v448, %v446
    %v651 = vpack.c.b16 %v449, %v447
    %v652 = vpack.c.b16 %v452, %v450
    %v653 = vpack.c.b16 %v453, %v451
    %v654 = vpack.c.b16 %v456, %v454
    %v655 = vpack.c.b16 %v457, %v455
    %v656 = vpack.c.b16 %v460, %v458
    %v657 = vpack.c.b16 %v461, %v459
    %v658 = vpack.c.b16 %v464, %v462
    %v659 = vpack.c.b16 %v465, %v463
    %v660 = vpack.c.b16 %v468, %v466
    %v661 = vpack.c.b16 %v469, %v467
    %v662 = vpack.c.b16 %v472, %v470
    %v663 = vpack.c.b16 %v473, %v471
    %v664 = vpack.c.b16 %v476, %v474
    %v665 = vpack.c.b16 %v477, %v475
    %v666 = vpack.c.b16 %v480, %v478
    %v667 = vpack.c.b16 %v481, %v479
    %v668 = vpack.c.b16 %v484, %v482
    %v669 = vpack.c.b16 %v485, %v483
    %v670 = vpack.c.b16 %v488, %v486
    %v671 = vpack.c.b16 %v489, %v487
    %v672 = vpack.c.b16 %v492, %v490
    %v673 = vpack.c.b16 %v493, %v491
    %v674 = vpack.c.b16 %v496, %v494
    %v675 = vpack.c.b16 %v497, %v495
    %v676 = vpack.c.b16 %v500, %v498
    %v677 = vpack.c.b16 %v501, %v499
    %v678 = vpack.c.b16 %v504, %v502
    %v679 = vpack.c.b16 %v505, %v503
    %v680 = vpack.c.b16 %v508, %v506
    %v681 = vpack.c.b16 %v509, %v507
    %v682 = vpack.c.b16 %v512, %v510
    %v683 = vpack.c.b16 %v513, %v511
    %v684 = vpack.c.b16 %v516, %v514
    %v685 = vpack.c.b16 %v517, %v515
    %v686 = vpack.c.b16 %v520, %v518
    %v687 = vpack.c.b16 %v521, %v519
    %v688 = vpack.c.b16 %v524, %v522
    %v689 = vpack.c.b16 %v525, %v523
    %v690 = vpack.c.b16 %v528, %v526
    %v691 = vpack.c.b16 %v529, %v527
    %v692 = vpack.c.b16 %v532, %v530
    %v693 = vpack.c.b16 %v533, %v531
    %v694 = vpack.c.b16 %v536, %v534
    %v695 = vpack.c.b16 %v537, %v535
    %v696 = vpack.c.b16 %v540, %v538
    %v697 = vpack.c.b16 %v541, %v539
    %v698 = vpack.c.b16 %v544, %v542
    %v699 = vpack.c.b16 %v545, %v543
    %v700 = vpack.c.b16 %v548, %v546
    %v701 = vpack.c.b16 %v549, %v547
    %v702 = vpack.c.b16 %v552, %v550
    %v703 = vpack.c.b16 %v553, %v551
    %v704 = vpack.c.b16 %v556, %v554
    %v705 = vpack.c.b16 %v557, %v555
    %v706 = vpack.c.b16 %v560, %v558
    %v707 = vpack.c.b16 %v561, %v559
    %v708 = vpack.c.b16 %v564, %v562
    %v709 = vpack.c.b16 %v565, %v563
    %v710 = vpack.c.b16 %v568, %v566
    %v711 = vpack.c.b16 %v569, %v567
    %v712 = vpack.c.b16 %v572, %v570
    %v713 = vpack.c.b16 %v573, %v571
    %v714 = vpack.c.b16 %v576, %v574
    %v715 = vpack.c.b16 %v577, %v575
    %v716 = vpack.c.b16 %v580, %v578
    %v717 = vpack.c.b16 %v581, %v579
    %v718 = vpack.c.b16 %v584, %v582
    %v719 = vpack.c.b16 %v585, %v583
    %v720 = vpack.c.b16 %v588, %v586
    %v721 = vpack.c.b16 %v589, %v587
    %v722 = vpack.c.b16 %v592, %v590
    %v723 = vpack.c.b16 %v593, %v591
    %v724 = vpack.c.b16 %v596, %v594
    %v725 = vpack.c.b16 %v597, %v595
    %v726 = vpack.c.b16 %v600, %v598
    %v727 = vpack.c.b16 %v601, %v599
    %v728 = vpack.c.b16 %v602, %v602
    %v729 = vpack.c.b16 %v603, %v603
    %vm854 = vcmask 850944
    %v856 = vsel %vm854, %v221, 0
    %vm858 = vcmask 1043456
    %v860 = vsel %vm858, %v728, 0
    %v863 = vsel %vm858, %v729, 0
    %865 = vmatprep.subr.bf16.mxu0 %v619
    %866 = vmatpush1.bf16.msra.mxu0 %v618
    %867 = vmatprep.subr.bf16.mxu0 %v617
    %868 = vmatpush1.bf16.msra.mxu0 %v616
    %869 = vmatprep.subr.bf16.mxu0 %v615
    %870 = vmatpush1.bf16.msra.mxu0 %v614
    %871 = vmatprep.subr.bf16.mxu0 %v613
    %872 = vmatpush1.bf16.msra.mxu0 %v612
    %873 = vmatprep.subr.bf16.mxu0 %v611
    %874 = vmatpush1.bf16.msra.mxu0 %v610
    %875 = vmatprep.subr.bf16.mxu0 %v609
    %876 = vmatpush1.bf16.msra.mxu0 %v608
    %877 = vmatprep.subr.bf16.mxu0 %v607
    %878 = vmatpush1.bf16.msra.mxu0 %v606
    %879 = vmatprep.subr.bf16.mxu0 %v605
    %880 = vmatpush1.bf16.msra.mxu0 %v604
    %881 = vmatprep.subr.bf16.mxu0 %v635
    %882 = vmatpush2.bf16.msra.mxu0 %v634
    %883 = vmatprep.subr.bf16.mxu0 %v633
    %884 = vmatpush2.bf16.msra.mxu0 %v632
    %885 = vmatprep.subr.bf16.mxu0 %v631
    %886 = vmatpush2.bf16.msra.mxu0 %v630
    %887 = vmatprep.subr.bf16.mxu0 %v629
    %888 = vmatpush2.bf16.msra.mxu0 %v628
    %889 = vmatprep.subr.bf16.mxu0 %v627
    %890 = vmatpush2.bf16.msra.mxu0 %v626
    %891 = vmatprep.subr.bf16.mxu0 %v625
    %892 = vmatpush2.bf16.msra.mxu0 %v624
    %893 = vmatprep.subr.bf16.mxu0 %v623
    %894 = vmatpush2.bf16.msra.mxu0 %v622
    %895 = vmatprep.subr.bf16.mxu0 %v621
    %896 = vmatpush2.bf16.msra.mxu0 %v620
    %897 = vmatprep.mubr.bf16.mxu0 %v215
    %898 = vmatmul.mubr.bf16.gmra.mxu0 %v214
    %v899 = vpop.f32.mrf.mxu0
    %v900 = vadd.f32 %v195, %v899
    %v901 = vpop.f32.mrf.mxu0
    %v902 = vadd.f32 %v199, %v901
    %v903 = vpop.f32.mrf.mxu0
    %v904 = vpop.f32.mrf.mxu0
    %905 = vdwg.mxu0
    %906 = vmatprep.subr.bf16.mxu0 %v651
    %907 = vmatpush1.bf16.msra.mxu0 %v650
    %908 = vmatprep.subr.bf16.mxu0 %v649
    %909 = vmatpush1.bf16.msra.mxu0 %v648
    %910 = vmatprep.subr.bf16.mxu0 %v647
    %911 = vmatpush1.bf16.msra.mxu0 %v646
    %912 = vmatprep.subr.bf16.mxu0 %v645
    %913 = vmatpush1.bf16.msra.mxu0 %v644
    %914 = vmatprep.subr.bf16.mxu0 %v643
    %915 = vmatpush1.bf16.msra.mxu0 %v642
    %916 = vmatprep.subr.bf16.mxu0 %v641
    %917 = vmatpush1.bf16.msra.mxu0 %v640
    %918 = vmatprep.subr.bf16.mxu0 %v639
    %919 = vmatpush1.bf16.msra.mxu0 %v638
    %920 = vmatprep.subr.bf16.mxu0 %v637
    %921 = vmatpush1.bf16.msra.mxu0 %v636
    %922 = vmatprep.subr.bf16.mxu0 %v667
    %923 = vmatpush2.bf16.msra.mxu0 %v666
    %924 = vmatprep.subr.bf16.mxu0 %v665
    %925 = vmatpush2.bf16.msra.mxu0 %v664
    %926 = vmatprep.subr.bf16.mxu0 %v663
    %927 = vmatpush2.bf16.msra.mxu0 %v662
    %928 = vmatprep.subr.bf16.mxu0 %v661
    %929 = vmatpush2.bf16.msra.mxu0 %v660
    %930 = vmatprep.subr.bf16.mxu0 %v659
    %931 = vmatpush2.bf16.msra.mxu0 %v658
    %932 = vmatprep.subr.bf16.mxu0 %v657
    %933 = vmatpush2.bf16.msra.mxu0 %v656
    %934 = vmatprep.subr.bf16.mxu0 %v655
    %935 = vmatpush2.bf16.msra.mxu0 %v654
    %936 = vmatprep.subr.bf16.mxu0 %v653
    %937 = vmatpush2.bf16.msra.mxu0 %v652
    %938 = vmatprep.mubr.bf16.mxu0 %v217
    %939 = vmatmul.mubr.bf16.gmra.mxu0 %v216
    %v940 = vpop.f32.mrf.mxu0
    %v941 = vadd.f32 %v900, %v940
    %v942 = vpop.f32.mrf.mxu0
    %v943 = vadd.f32 %v902, %v942
    %v944 = vpop.f32.mrf.mxu0
    %v945 = vpop.f32.mrf.mxu0
    %946 = vdwg.mxu0
    %947 = vmatprep.subr.bf16.mxu0 %v683
    %948 = vmatpush1.bf16.msra.mxu0 %v682
    %949 = vmatprep.subr.bf16.mxu0 %v681
    %950 = vmatpush1.bf16.msra.mxu0 %v680
    %951 = vmatprep.subr.bf16.mxu0 %v679
    %952 = vmatpush1.bf16.msra.mxu0 %v678
    %953 = vmatprep.subr.bf16.mxu0 %v677
    %954 = vmatpush1.bf16.msra.mxu0 %v676
    %955 = vmatprep.subr.bf16.mxu0 %v675
    %956 = vmatpush1.bf16.msra.mxu0 %v674
    %957 = vmatprep.subr.bf16.mxu0 %v673
    %958 = vmatpush1.bf16.msra.mxu0 %v672
    %959 = vmatprep.subr.bf16.mxu0 %v671
    %960 = vmatpush1.bf16.msra.mxu0 %v670
    %961 = vmatprep.subr.bf16.mxu0 %v669
    %962 = vmatpush1.bf16.msra.mxu0 %v668
    %963 = vmatprep.subr.bf16.mxu0 %v699
    %964 = vmatpush2.bf16.msra.mxu0 %v698
    %965 = vmatprep.subr.bf16.mxu0 %v697
    %966 = vmatpush2.bf16.msra.mxu0 %v696
    %967 = vmatprep.subr.bf16.mxu0 %v695
    %968 = vmatpush2.bf16.msra.mxu0 %v694
    %969 = vmatprep.subr.bf16.mxu0 %v693
    %970 = vmatpush2.bf16.msra.mxu0 %v692
    %971 = vmatprep.subr.bf16.mxu0 %v691
    %972 = vmatpush2.bf16.msra.mxu0 %v690
    %973 = vmatprep.subr.bf16.mxu0 %v689
    %974 = vmatpush2.bf16.msra.mxu0 %v688
    %975 = vmatprep.subr.bf16.mxu0 %v687
    %976 = vmatpush2.bf16.msra.mxu0 %v686
    %977 = vmatprep.subr.bf16.mxu0 %v685
    %978 = vmatpush2.bf16.msra.mxu0 %v684
    %979 = vmatprep.mubr.bf16.mxu0 %v219
    %980 = vmatmul.mubr.bf16.gmra.mxu0 %v218
    %v981 = vpop.f32.mrf.mxu0
    %v982 = vadd.f32 %v941, %v981
    %v983 = vpop.f32.mrf.mxu0
    %v984 = vadd.f32 %v943, %v983
    %v985 = vpop.f32.mrf.mxu0
    %v986 = vpop.f32.mrf.mxu0
    %987 = vdwg.mxu0
    %988 = vmatprep.subr.bf16.mxu0 %v715
    %989 = vmatpush1.bf16.msra.mxu0 %v714
    %990 = vmatprep.subr.bf16.mxu0 %v713
    %991 = vmatpush1.bf16.msra.mxu0 %v712
    %992 = vmatprep.subr.bf16.mxu0 %v711
    %993 = vmatpush1.bf16.msra.mxu0 %v710
    %994 = vmatprep.subr.bf16.mxu0 %v709
    %995 = vmatpush1.bf16.msra.mxu0 %v708
    %996 = vmatprep.subr.bf16.mxu0 %v707
    %997 = vmatpush1.bf16.msra.mxu0 %v706
    %998 = vmatprep.subr.bf16.mxu0 %v705
    %999 = vmatpush1.bf16.msra.mxu0 %v704
    %1000 = vmatprep.subr.bf16.mxu0 %v703
    %1001 = vmatpush1.bf16.msra.mxu0 %v702
    %1002 = vmatprep.subr.bf16.mxu0 %v701
    %1003 = vmatpush1.bf16.msra.mxu0 %v700
    %1004 = vmatprep.subr.bf16.mxu0 0
    %1005 = vmatpush2.bf16.msra.mxu0 0
    %1006 = vmatprep.subr.bf16.mxu0 %v863
    %1007 = vmatpush2.bf16.msra.mxu0 %v860
    %1008 = vmatprep.subr.bf16.mxu0 %v727
    %1009 = vmatpush2.bf16.msra.mxu0 %v726
    %1010 = vmatprep.subr.bf16.mxu0 %v725
    %1011 = vmatpush2.bf16.msra.mxu0 %v724
    %1012 = vmatprep.subr.bf16.mxu0 %v723
    %1013 = vmatpush2.bf16.msra.mxu0 %v722
    %1014 = vmatprep.subr.bf16.mxu0 %v721
    %1015 = vmatpush2.bf16.msra.mxu0 %v720
    %1016 = vmatprep.subr.bf16.mxu0 %v719
    %1017 = vmatpush2.bf16.msra.mxu0 %v718
    %1018 = vmatprep.subr.bf16.mxu0 %v717
    %1019 = vmatpush2.bf16.msra.mxu0 %v716
    %1020 = vmatprep.mubr.bf16.mxu0 %v856
    %1021 = vmatmul.mubr.bf16.gmra.mxu0 %v220
    %v1022 = vpop.f32.mrf.mxu0
    %v1023 = vadd.f32 %v982, %v1022
    %v1024 = vpop.f32.mrf.mxu0
    %v1025 = vadd.f32 %v984, %v1024
    %v1026 = vpop.f32.mrf.mxu0
    %v1027 = vpop.f32.mrf.mxu0
    %1028 = vdwg.mxu0
    %v1029 = vmax.f32 %v1023, 0.0
    %v1030 = vmax.f32 %v1025, 0.0
    %v1031 = vld [vmem:[#allocation7] sm:$0xff]
    %v1032 = vld [vmem:[#allocation7 + $0x8] sm:$0xff]
    %v1033 = vld [vmem:[#allocation7 + $0x10] sm:$0xff]
    %v1034 = vld [vmem:[#allocation7 + $0x18] sm:$0xff]
    %v1035 = vld [vmem:[#allocation7 + $0x20] sm:$0xff]
    %v1036 = vld [vmem:[#allocation7 + $0x28] sm:$0xff]
    %v1037 = vld [vmem:[#allocation7 + $0x30] sm:$0xff]
    %v1038 = vld [vmem:[#allocation7 + $0x38] sm:$0xff]
    %v1039 = vld [vmem:[#allocation7 + $0x40] sm:$0xff]
    %v1040 = vld [vmem:[#allocation7 + $0x48] sm:$0xff]
    %v1041 = vld [vmem:[#allocation7 + $0x50] sm:$0xff]
    %v1042 = vld [vmem:[#allocation7 + $0x58] sm:$0xff]
    %v1043 = vld [vmem:[#allocation7 + $0x60] sm:$0xff]
    %v1044 = vld [vmem:[#allocation7 + $0x68] sm:$0xff]
    %v1045 = vld [vmem:[#allocation7 + $0x70] sm:$0xff]
    %v1046 = vld [vmem:[#allocation7 + $0x78] sm:$0xff]
    %v1047 = vld [vmem:[#allocation7 + $0x80] sm:$0xff]
    %v1048 = vld [vmem:[#allocation7 + $0x88] sm:$0xff]
    %v1049 = vld [vmem:[#allocation7 + $0x90] sm:$0xff]
    %v1050 = vld [vmem:[#allocation7 + $0x98] sm:$0xff]
    %v1051 = vld [vmem:[#allocation7 + $0xa0] sm:$0xff]
    %v1052 = vld [vmem:[#allocation7 + $0xa8] sm:$0xff]
    %v1053 = vld [vmem:[#allocation7 + $0xb0] sm:$0xff]
    %v1054 = vld [vmem:[#allocation7 + $0xb8] sm:$0xff]
    %v1055 = vld [vmem:[#allocation7 + $0xc0] sm:$0xff]
    %v1056 = vld [vmem:[#allocation7 + $0xc8] sm:$0xff]
    %v1057 = vld [vmem:[#allocation7 + $0xd0] sm:$0xff]
    %v1058 = vld [vmem:[#allocation7 + $0xd8] sm:$0xff]
    %v1059 = vld [vmem:[#allocation7 + $0xe0] sm:$0xff]
    %v1060 = vld [vmem:[#allocation7 + $0xe8] sm:$0xff]
    %v1061 = vld [vmem:[#allocation7 + $0xf0] sm:$0xff]
    %v1062 = vld [vmem:[#allocation7 + $0xf8] sm:$0xff]
    %v1063 = vld [vmem:[%s4] sm:$0x1]
    %v1065 = vlaneseq
    %v1066 = vshrl.u32 %v1065, 7
    %v1067 = vsub.s32 0, %v1066
    %v1068 = vrot.slane %v1063, %v1067
    %1070 = vmatprep.subr.mxu0 0.0
    %1071 = vmatpush1.msra.mxu0 %v1046
    %1072 = vmatprep.subr.mxu0 0.0
    %1073 = vmatpush1.msra.mxu0 %v1045
    %1074 = vmatprep.subr.mxu0 0.0
    %1075 = vmatpush1.msra.mxu0 %v1044
    %1076 = vmatprep.subr.mxu0 0.0
    %1077 = vmatpush1.msra.mxu0 %v1043
    %1078 = vmatprep.subr.mxu0 0.0
    %1079 = vmatpush1.msra.mxu0 %v1042
    %1080 = vmatprep.subr.mxu0 0.0
    %1081 = vmatpush1.msra.mxu0 %v1041
    %1082 = vmatprep.subr.mxu0 0.0
    %1083 = vmatpush1.msra.mxu0 %v1040
    %1084 = vmatprep.subr.mxu0 0.0
    %1085 = vmatpush1.msra.mxu0 %v1039
    %1086 = vmatprep.subr.mxu0 0.0
    %1087 = vmatpush1.msra.mxu0 %v1038
    %1088 = vmatprep.subr.mxu0 0.0
    %1089 = vmatpush1.msra.mxu0 %v1037
    %1090 = vmatprep.subr.mxu0 0.0
    %1091 = vmatpush1.msra.mxu0 %v1036
    %1092 = vmatprep.subr.mxu0 0.0
    %1093 = vmatpush1.msra.mxu0 %v1035
    %1094 = vmatprep.subr.mxu0 0.0
    %1095 = vmatpush1.msra.mxu0 %v1034
    %1096 = vmatprep.subr.mxu0 0.0
    %1097 = vmatpush1.msra.mxu0 %v1033
    %1098 = vmatprep.subr.mxu0 0.0
    %1099 = vmatpush1.msra.mxu0 %v1032
    %1100 = vmatprep.subr.mxu0 0.0
    %1101 = vmatpush1.msra.mxu0 %v1031
    %1102 = vmatprep.subr.mxu0 0.0
    %1103 = vmatpush2.msra.mxu0 %v1062
    %1104 = vmatprep.subr.mxu0 0.0
    %1105 = vmatpush2.msra.mxu0 %v1061
    %1106 = vmatprep.subr.mxu0 0.0
    %1107 = vmatpush2.msra.mxu0 %v1060
    %1108 = vmatprep.subr.mxu0 0.0
    %1109 = vmatpush2.msra.mxu0 %v1059
    %1110 = vmatprep.subr.mxu0 0.0
    %1111 = vmatpush2.msra.mxu0 %v1058
    %1112 = vmatprep.subr.mxu0 0.0
    %1113 = vmatpush2.msra.mxu0 %v1057
    %1114 = vmatprep.subr.mxu0 0.0
    %1115 = vmatpush2.msra.mxu0 %v1056
    %1116 = vmatprep.subr.mxu0 0.0
    %1117 = vmatpush2.msra.mxu0 %v1055
    %1118 = vmatprep.subr.mxu0 0.0
    %1119 = vmatpush2.msra.mxu0 %v1054
    %1120 = vmatprep.subr.mxu0 0.0
    %1121 = vmatpush2.msra.mxu0 %v1053
    %1122 = vmatprep.subr.mxu0 0.0
    %1123 = vmatpush2.msra.mxu0 %v1052
    %1124 = vmatprep.subr.mxu0 0.0
    %1125 = vmatpush2.msra.mxu0 %v1051
    %1126 = vmatprep.subr.mxu0 0.0
    %1127 = vmatpush2.msra.mxu0 %v1050
    %1128 = vmatprep.subr.mxu0 0.0
    %1129 = vmatpush2.msra.mxu0 %v1049
    %1130 = vmatprep.subr.mxu0 0.0
    %1131 = vmatpush2.msra.mxu0 %v1048
    %1132 = vmatprep.subr.mxu0 0.0
    %1133 = vmatpush2.msra.mxu0 %v1047
    %1134 = vmatprep.mubr.f32.mxu0 %v1030
    %1135 = vmatmul.mubr.f32.gmra.mxu0 %v1029
    %v1136 = vpop.f32.mrf.mxu0
    %v1137 = vadd.f32 %v1068, %v1136
    %v1138 = vpop.f32.mrf.mxu0
    %1139 = vdwg.mxu0
    %1140 = vst [vmem:[#allocation8] sm:$0xff] %v1137
    // Predicated region
    $region34: #{tpu_custom_call.1} parent=1 // pred_check
      _
    $region35: #{tpu_custom_call.1} parent=1 // pred_check_branch
      %1142 = sbr.rel (0) target = $region37
    $region36: #{tpu_custom_call.1} parent=1 // pred_region
      %s1144 = ssub.s32 128, 128
      %1145 = vsyncadd [#allocation4], %s1144
      %s1147 = sshll.u32 [#allocation8], 4
      %s1148 = int_to_ptr.vmem [resolvable:$true] %s1147
      %1150 = dma.vmem_to_hbm [thread:$0]  %s1148, 128, %s5, [#allocation4]
    $region37: #{tpu_custom_call.1} parent=1 // pred_fallthru
      _
    // Predicated region
    $region38: #{tpu_custom_call.1} parent=1 // pred_check
      _
    $region39: #{tpu_custom_call.1} parent=1 // pred_check_branch
      %1152 = sbr.rel (0) target = $region41
    $region40: #{tpu_custom_call.1} parent=1 // pred_region
      %1153 = dma.done [#allocation4], 128
    $region41: #{tpu_custom_call.1} parent=1 // pred_fallthru
      _
    %1154 = vsyncpa [#allocation3], 1
    %1155 = vsyncpa [#allocation6], 1
    %1156 = vsyncpa [#allocation4], 1

</llo_original>
